<compile_context>
chip_gen: v7x
topology: tpu7x:2x2x1
jax: 0.10.0
libtpu: 0.0.40
codegen_flags: <defaults>
</compile_context>

<pallas_src>
import jax
import jax.numpy as jnp
from jax import lax
from jax.experimental import pallas as pl
from jax.experimental.pallas import tpu as pltpu


# ----------------------------------------------------------------------------
# Hardware / tiling helpers
# ----------------------------------------------------------------------------

def _vmem_capacity_bytes():
    """Per-TensorCore VMEM capacity; conservative (v7x) fallback if unknown."""
    try:
        cap = int(getattr(pltpu.get_tpu_info(), "vmem_capacity_bytes"))
        if cap > 0:
            return cap
    except Exception:
        pass
    return 64 * 1024 * 1024


def _sublane_multiple(itemsize):
    # f32 -> 8, bf16 -> 16, int8/fp8 -> 32 (packed rows per sublane group)
    return {4: 8, 2: 16, 1: 32}.get(int(itemsize), 8)


def _choose_t_tile(B, T, H, itemsize, vmem_cap):
    """Pick a T-tile: multiple of the dtype's sublane packing, sized so the
    double-buffered working set fits the chip's VMEM generously."""
    sub = _sublane_multiple(itemsize)
    if vmem_cap >= 96 * 1024 * 1024:          # v5e / v6e: 128 MiB per TC
        target = 12 * 1024 * 1024             # per-input, per-buffer tile bytes
    else:                                     # v7x: 64 MiB per TC
        target = 5 * 1024 * 1024
    bytes_per_t_row = max(1, B * H * itemsize)
    tT = (target // bytes_per_t_row) // sub * sub
    # TODO(synk): for very large B*H (min tile > budget) tile over B as well;
    # here we fall back to the minimum sublane tile and assert later if it
    # cannot fit VMEM.
    tT = max(sub, tT)
    if tT >= T:
        tT = T                                # full axis: no divisibility rule
    return tT


# ----------------------------------------------------------------------------
# Kernels
# ----------------------------------------------------------------------------

def _make_stream_kernel(B, T, H, tT, npc, mask_needed):
    """Streaming sum over T into per-core (1, B, H) f32 partial accumulators."""

    def kernel(fs_ref, ft_ref, out_s_ref, out_t_ref):
        c = pl.program_id(0)     # core-split index (parallel)
        t = pl.program_id(1)     # T-tile index within this core (arbitrary)

        @pl.when(t == 0)
        def _init():
            out_s_ref[...] = jnp.zeros_like(out_s_ref)
            out_t_ref[...] = jnp.zeros_like(out_t_ref)

        def _accum_full():
            # Cast folded into the reduce: no (B, tT, H) f32 temporaries.
            out_s_ref[...] += jnp.sum(fs_ref[...], axis=1,
                                      dtype=jnp.float32)[None]
            out_t_ref[...] += jnp.sum(ft_ref[...], axis=1,
                                      dtype=jnp.float32)[None]

        if mask_needed:
            g = c * npc + t                       # global (unclamped) tile index
            tile_is_partial = (g + 1) * tT > T    # also true for padding tiles

            @pl.when(jnp.logical_not(tile_is_partial))
            def _():
                _accum_full()

            @pl.when(tile_is_partial)
            def _():
                row = lax.broadcasted_iota(jnp.int32, (tT, H), 0)
                valid = (row + g * tT) < T
                fs = jnp.where(valid[None], fs_ref[...].astype(jnp.float32), 0.0)
                ft = jnp.where(valid[None], ft_ref[...].astype(jnp.float32), 0.0)
                out_s_ref[...] += jnp.sum(fs, axis=1)[None]
                out_t_ref[...] += jnp.sum(ft, axis=1)[None]
        else:
            _accum_full()

    return kernel


def _make_epilogue_kernel(B, T):
    """Combine per-core partials, apply 1/T (mean), Grams, Frobenius-normalized
    difference.  Uses the inner-product form so no normalized B x B matrices
    are materialized:  ||Gt/||Gt|| - Gs/||Gs||||_F^2 = 2 - 2<Gs,Gt>/(||Gs|| ||Gt||)."""
    inv_t = 1.0 / float(T)
    inv_b2 = 1.0 / float(B * B)

    def kernel(ps_ref, pt_ref, out_ref):
        # (ncores, B, H) partial sums -> (B, H) means over T (matches torch).
        f_s = jnp.sum(ps_ref[...], axis=0) * inv_t
        f_t = jnp.sum(pt_ref[...], axis=0) * inv_t
        dims = (((1,), (1,)), ((), ()))            # contract over H
        g_s = lax.dot_general(f_s, f_s, dims, preferred_element_type=jnp.float32)
        g_t = lax.dot_general(f_t, f_t, dims, preferred_element_type=jnp.float32)
        ss = jnp.sum(g_s * g_s)
        tt = jnp.sum(g_t * g_t)
        st = jnp.sum(g_s * g_t)
        # Separate rsqrt factors avoid float32 overflow of ss*tt.
        loss = (2.0 - 2.0 * st * lax.rsqrt(ss) * lax.rsqrt(tt)) * inv_b2
        out_ref[0, 0] = loss

    return kernel


# ----------------------------------------------------------------------------
# Wrapper
# ----------------------------------------------------------------------------

def _correlation_loss_pallas(f_s_3d, f_t_3d, t_tile=None):
    """f_s_3d, f_t_3d: (B, T, H) arrays. Returns loss of shape (1,) float32."""
    B, T, H = f_s_3d.shape
    assert f_t_3d.shape == (B, T, H), (f_s_3d.shape, f_t_3d.shape)

    s_item = jnp.dtype(f_s_3d.dtype).itemsize
    t_item = jnp.dtype(f_t_3d.dtype).itemsize
    itemsize = max(s_item, t_item)
    sub = _sublane_multiple(itemsize)
    vmem_cap = _vmem_capacity_bytes()

    if t_tile is None:
        tT = _choose_t_tile(B, T, H, itemsize, vmem_cap)
    else:
        tT = min(int(t_tile), T)
        if tT < T:
            assert tT % sub == 0, (tT, sub)

    total_tiles = pl.cdiv(T, tT)
    # Split the T stream across TensorCores (2x HBM BW on v7x); near-free when
    # there is only one core (the parallel axis just serializes).
    core_split = 2 if total_tiles >= 2 else 1
    npc = pl.cdiv(total_tiles, core_split)        # tiles per core
    has_oob_tiles = core_split * npc > total_tiles
    mask_needed = has_oob_tiles or (T % tT != 0)

    # Working set: 2 inputs x 2 pipeline buffers x tile + double-buffered
    # (1, B, H) f32 output blocks + slack.
    tile_bytes = B * tT * H * itemsize
    working = 4 * tile_bytes + 2 * 2 * B * H * 4 + (2 << 20)
    assert working <= int(0.9 * vmem_cap), (
        "Correlation_loss: working set %d B exceeds ~90%% of VMEM (%d B); "
        "this shape needs B-tiling." % (working, vmem_cap))
    vmem_limit = int(min(max(working + (8 << 20), 32 << 20), 0.9 * vmem_cap))

    last_block = total_tiles - 1
    if has_oob_tiles:
        # Clamp padding tiles onto a valid block; the in-kernel mask zeroes them.
        def in_map(c, t):
            return (0, jnp.minimum(c * npc + t, last_block), 0)
    else:
        def in_map(c, t):
            return (0, c * npc + t, 0)

    def out_map(c, t):
        return (c, 0, 0)

    stream_bytes = int(B * T * H * (s_item + t_item) + 2 * core_split * B * H * 4)
    stream_flops = int(2 * B * T * H)

    partial_s, partial_t = pl.pallas_call(
        _make_stream_kernel(B, T, H, tT, npc, mask_needed),
        out_shape=(jax.ShapeDtypeStruct((core_split, B, H), jnp.float32),
                   jax.ShapeDtypeStruct((core_split, B, H), jnp.float32)),
        grid=(core_split, npc),
        in_specs=[
            pl.BlockSpec((B, tT, H), in_map),
            pl.BlockSpec((B, tT, H), in_map),
        ],
        out_specs=(
            pl.BlockSpec((1, B, H), out_map),
            pl.BlockSpec((1, B, H), out_map),
        ),
        compiler_params=pltpu.CompilerParams(
            dimension_semantics=("parallel", "arbitrary"),
            vmem_limit_bytes=vmem_limit,
        ),
        cost_estimate=pl.CostEstimate(
            flops=stream_flops, transcendentals=0, bytes_accessed=stream_bytes),
    )(f_s_3d, f_t_3d)

    loss = pl.pallas_call(
        _make_epilogue_kernel(B, T),
        out_shape=jax.ShapeDtypeStruct((1, 1), jnp.float32),
        grid=(1,),
        in_specs=[
            pl.BlockSpec((core_split, B, H), lambda i: (0, 0, 0)),
            pl.BlockSpec((core_split, B, H), lambda i: (0, 0, 0)),
        ],
        out_specs=pl.BlockSpec((1, 1), lambda i: (0, 0),
                               memory_space=pltpu.MemorySpace.SMEM),
        compiler_params=pltpu.CompilerParams(
            dimension_semantics=("arbitrary",)),
        cost_estimate=pl.CostEstimate(
            flops=int(4 * B * B * H + 8 * B * B), transcendentals=2,
            bytes_accessed=int(2 * core_split * B * H * 4 + 4)),
    )(partial_s, partial_t)

    # match torch's (G_diff*G_diff).view(-1,1).sum(0) -> shape (1,)
    return loss.reshape((1,))


class CorrelationLossJAX:
    """JAX/Pallas port of the PyTorch Correlation_loss module."""

    def __init__(self, key=None):
        # nn.Linear(2, 2): deterministic init (unused in forward, kept for parity).
        if key is None:
            key = jax.random.PRNGKey(42)
        kw, kb = jax.random.split(key)
        bound = 1.0 / jnp.sqrt(2.0)
        self.linear_weight = jax.random.uniform(
            kw, (2, 2), jnp.float32, minval=-bound, maxval=bound)
        self.linear_bias = jax.random.uniform(
            kb, (2,), jnp.float32, minval=-bound, maxval=bound)

    def __call__(self, teacher_layers, student_layers, pred, target):
        f_s = pred[student_layers[-1]]      # (B, T, H)
        f_t = target[teacher_layers[-1]]    # (B, T, H)
        return _correlation_loss_pallas(f_s, f_t)


def _reference_loss(f_s_3d, f_t_3d):
    """Pure-JAX reference mirroring the PyTorch math (independent check)."""
    f_s = jnp.mean(f_s_3d.astype(jnp.float32), axis=1)
    f_t = jnp.mean(f_t_3d.astype(jnp.float32), axis=1)
    bsz = f_s.shape[0]
    g_s = f_s @ f_s.T
    g_s = g_s / jnp.linalg.norm(g_s)
    g_t = f_t @ f_t.T
    g_t = g_t / jnp.linalg.norm(g_t)
    d = g_t - g_s
    return (jnp.sum(d * d) / (bsz * bsz)).reshape((1,))


if __name__ == "__main__":
    key = jax.random.PRNGKey(0)
    k1, k2, k3, k4 = jax.random.split(key, 4)

    module = CorrelationLossJAX()

    # --- Test 1: small f32 input through the module interface (single tile) ---
    B, T, H = 2, 8, 32
    pred = {"student_layer_0": jax.random.normal(k1, (B, T, H), jnp.float32)}
    target = {"teacher_layer_0": jax.random.normal(k2, (B, T, H), jnp.float32)}
    loss = module(["teacher_layer_0"], ["student_layer_0"], pred, target)
    loss = jax.block_until_ready(loss)
    ref = _reference_loss(pred["student_layer_0"], target["teacher_layer_0"])
    assert loss.shape == (1,), loss.shape
    assert jnp.allclose(loss, ref, rtol=1e-5, atol=1e-6), (loss, ref)

    # --- Test 2: bf16 input with forced T-tiling -> exercises the core-split
    # streaming path, the gated tail mask, and the fused bf16->f32 reduction ---
    B2, T2, H2 = 2, 56, 32
    fs2 = jax.random.normal(k3, (B2, T2, H2), jnp.float32).astype(jnp.bfloat16)
    ft2 = jax.random.normal(k4, (B2, T2, H2), jnp.float32).astype(jnp.bfloat16)
    loss2 = _correlation_loss_pallas(fs2, ft2, t_tile=16)
    loss2 = jax.block_until_ready(loss2)
    ref2 = _reference_loss(fs2, ft2)
    assert loss2.shape == (1,), loss2.shape
    assert jnp.allclose(loss2, ref2, rtol=1e-4, atol=1e-5), (loss2, ref2)

    print("KERNEL_OK")
</pallas_src>

<mosaic_0001>
module attributes {stable_mosaic.version = 11 : i64} {
  func.func @kernel(%arg0: i32, %arg1: i32, %arg2: memref<2x8x32xf32, #tpu.memory_space<vmem>>, %arg3: memref<2x8x32xf32, #tpu.memory_space<vmem>>, %arg4: memref<1x2x32xf32, #tpu.memory_space<vmem>>, %arg5: memref<1x2x32xf32, #tpu.memory_space<vmem>>) attributes {dimension_semantics = [#tpu.dimension_semantics<parallel>, #tpu.dimension_semantics<arbitrary>], iteration_bounds = array<i64: 1, 1>, scalar_prefetch = 0 : i64, scratch_operands = 0 : i64, tpu.core_type = #tpu.core_type<tc>, window_params = [{transform_indices = @transform_0, window_bounds = array<i64: 2, 8, 32>}, {transform_indices = @transform_1, window_bounds = array<i64: 2, 8, 32>}, {transform_indices = @transform_2, window_bounds = array<i64: 1, 2, 32>}, {transform_indices = @transform_3, window_bounds = array<i64: 1, 2, 32>}]} {
    %c0_i32 = arith.constant 0 : i32
    %0 = arith.cmpi eq, %arg1, %c0_i32 : i32
    %1 = arith.extui %0 : i1 to i32
    %c0_i32_0 = arith.constant 0 : i32
    %2 = arith.cmpi ne, %1, %c0_i32_0 : i32
    scf.if %2 {
      %cst_19 = arith.constant 0.000000e+00 : f32
      %15 = vector.broadcast %cst_19 : f32 to vector<1x2x32xf32>
      %c0_20 = arith.constant 0 : index
      %c0_21 = arith.constant 0 : index
      %c0_22 = arith.constant 0 : index
      %16 = vector.load %arg4[%c0_20, %c0_21, %c0_22] : memref<1x2x32xf32, #tpu.memory_space<vmem>>, vector<1x2x32xf32>
      tpu.vector_store %arg4[%c0_20, %c0_21, %c0_22], %15 {strides = array<i32>} : memref<1x2x32xf32, #tpu.memory_space<vmem>>, vector<1x2x32xf32>,
      %cst_23 = arith.constant 0.000000e+00 : f32
      %17 = vector.broadcast %cst_23 : f32 to vector<1x2x32xf32>
      %c0_24 = arith.constant 0 : index
      %c0_25 = arith.constant 0 : index
      %c0_26 = arith.constant 0 : index
      %18 = vector.load %arg5[%c0_24, %c0_25, %c0_26] : memref<1x2x32xf32, #tpu.memory_space<vmem>>, vector<1x2x32xf32>
      tpu.vector_store %arg5[%c0_24, %c0_25, %c0_26], %17 {strides = array<i32>} : memref<1x2x32xf32, #tpu.memory_space<vmem>>, vector<1x2x32xf32>,
    } else {
    }
    %c0 = arith.constant 0 : index
    %c0_1 = arith.constant 0 : index
    %c0_2 = arith.constant 0 : index
    %3 = vector.load %arg4[%c0, %c0_1, %c0_2] : memref<1x2x32xf32, #tpu.memory_space<vmem>>, vector<1x2x32xf32>
    %c0_3 = arith.constant 0 : index
    %c0_4 = arith.constant 0 : index
    %c0_5 = arith.constant 0 : index
    %4 = vector.load %arg2[%c0_3, %c0_4, %c0_5] : memref<2x8x32xf32, #tpu.memory_space<vmem>>, vector<2x8x32xf32>
    %cst = arith.constant dense<0.000000e+00> : vector<2x32xf32>
    %5 = vector.multi_reduction <add>, %4, %cst [1] : vector<2x8x32xf32> to vector<2x32xf32>
    %6 = vector.shape_cast %5 : vector<2x32xf32> to vector<1x2x32xf32>
    %7 = arith.addf %3, %6 : vector<1x2x32xf32>
    %c0_6 = arith.constant 0 : index
    %c0_7 = arith.constant 0 : index
    %c0_8 = arith.constant 0 : index
    %8 = vector.load %arg4[%c0_6, %c0_7, %c0_8] : memref<1x2x32xf32, #tpu.memory_space<vmem>>, vector<1x2x32xf32>
    tpu.vector_store %arg4[%c0_6, %c0_7, %c0_8], %7 {strides = array<i32>} : memref<1x2x32xf32, #tpu.memory_space<vmem>>, vector<1x2x32xf32>,
    %c0_9 = arith.constant 0 : index
    %c0_10 = arith.constant 0 : index
    %c0_11 = arith.constant 0 : index
    %9 = vector.load %arg5[%c0_9, %c0_10, %c0_11] : memref<1x2x32xf32, #tpu.memory_space<vmem>>, vector<1x2x32xf32>
    %c0_12 = arith.constant 0 : index
    %c0_13 = arith.constant 0 : index
    %c0_14 = arith.constant 0 : index
    %10 = vector.load %arg3[%c0_12, %c0_13, %c0_14] : memref<2x8x32xf32, #tpu.memory_space<vmem>>, vector<2x8x32xf32>
    %cst_15 = arith.constant dense<0.000000e+00> : vector<2x32xf32>
    %11 = vector.multi_reduction <add>, %10, %cst_15 [1] : vector<2x8x32xf32> to vector<2x32xf32>
    %12 = vector.shape_cast %11 : vector<2x32xf32> to vector<1x2x32xf32>
    %13 = arith.addf %9, %12 : vector<1x2x32xf32>
    %c0_16 = arith.constant 0 : index
    %c0_17 = arith.constant 0 : index
    %c0_18 = arith.constant 0 : index
    %14 = vector.load %arg5[%c0_16, %c0_17, %c0_18] : memref<1x2x32xf32, #tpu.memory_space<vmem>>, vector<1x2x32xf32>
    tpu.vector_store %arg5[%c0_16, %c0_17, %c0_18], %13 {strides = array<i32>} : memref<1x2x32xf32, #tpu.memory_space<vmem>>, vector<1x2x32xf32>,
    return
  }
  func.func @transform_0(%arg0: i32, %arg1: i32) -> (i32, i32, i32) {
    %c1_i32 = arith.constant 1 : i32
    %0 = arith.muli %arg0, %c1_i32 : i32
    %1 = arith.addi %0, %arg1 : i32
    %c0_i32 = arith.constant 0 : i32
    %c0_i32_0 = arith.constant 0 : i32
    %c0_i32_1 = arith.constant 0 : i32
    return %c0_i32, %1, %c0_i32_0 : i32, i32, i32
  }
  func.func @transform_1(%arg0: i32, %arg1: i32) -> (i32, i32, i32) {
    %c1_i32 = arith.constant 1 : i32
    %0 = arith.muli %arg0, %c1_i32 : i32
    %1 = arith.addi %0, %arg1 : i32
    %c0_i32 = arith.constant 0 : i32
    %c0_i32_0 = arith.constant 0 : i32
    %c0_i32_1 = arith.constant 0 : i32
    return %c0_i32, %1, %c0_i32_0 : i32, i32, i32
  }
  func.func @transform_2(%arg0: i32, %arg1: i32) -> (i32, i32, i32) {
    %c0_i32 = arith.constant 0 : i32
    %c0_i32_0 = arith.constant 0 : i32
    %c0_i32_1 = arith.constant 0 : i32
    return %arg0, %c0_i32, %c0_i32_0 : i32, i32, i32
  }
  func.func @transform_3(%arg0: i32, %arg1: i32) -> (i32, i32, i32) {
    %c0_i32 = arith.constant 0 : i32
    %c0_i32_0 = arith.constant 0 : i32
    %c0_i32_1 = arith.constant 0 : i32
    return %arg0, %c0_i32, %c0_i32_0 : i32, i32, i32
  }
}

</mosaic_0001>

<llo_original>
// kernel: tpu_custom_call.1
$region0: #{tpu_custom_call.1}
  #allocation0 [shape = 'u32[]', space=smem, size = 0x4, offset = 0x4, fixed_abs, tag = 'smem constant byte address 0x4 - core index']
  #allocation1 [shape = 'u32[144,128]{1,0:T(1,128)}', space=vmem, size = 0x12000, scoped, tag = 'internal scratch']
  %s0 = inlined_call_operand.hbm [shape: f32[2,8,32], index: 0, kind: input, shape index: {}]
  %s1 = inlined_call_operand.hbm [shape: f32[2,8,32], index: 1, kind: input, shape index: {}]
  %s2 = inlined_call_operand.hbm [shape: f32[1,2,32], index: 2, kind: output, shape index: {0}]
  %s3 = inlined_call_operand.hbm [shape: f32[1,2,32], index: 3, kind: output, shape index: {1}]
  %4 = xla_tuple %s2, %s3
  %s5 = sld [smem:[#allocation0]]
  $region38: #{tpu_custom_call.1} parent=0
    _
  %s7 = ssub.s32 1, %s5
  %s8 = scalar_select 0, %s7, %s5
  $region1: #{tpu_custom_call.1} parent=0
    #allocation2 [shape = 'u8[8192]{0}', space=vmem, size = 0x2000, scoped, tag = 'input window, operand 0, single buffered']
    #allocation3 [shape = 's32[1]{0}', space=sflag, size = 0x4, scoped, tag = 'scoped memory for tpu_custom_call.1']
    #allocation4 [shape = 's32[1]{0}', space=sflag, size = 0x4, scoped, tag = 'scoped memory for tpu_custom_call.1']
    #allocation5 [shape = 'u8[8192]{0}', space=vmem, size = 0x2000, scoped, tag = 'input window, operand 1, single buffered']
    #allocation6 [shape = 's32[1]{0}', space=sflag, size = 0x4, scoped, tag = 'scoped memory for tpu_custom_call.1']
    #allocation7 [shape = 'u8[1024]{0}', space=vmem, size = 0x400, scoped, tag = 'output window, operand 0, single buffered']
    #allocation8 [shape = 'u8[1024]{0}', space=vmem, size = 0x400, scoped, tag = 'output window, operand 1, single buffered']
    #allocation9 [shape = 's32[1]{0}', space=sflag, size = 0x4, scoped, tag = 'scoped memory for tpu_custom_call.1']
    %9 = vsyncpa [#allocation3], 0
    %10 = vsyncpa [#allocation6], 0
    %11 = vsyncpa [#allocation4], 0
    %12 = vsyncpa [#allocation9], 0
    // Predicated region
    $region2: #{tpu_custom_call.1} parent=1 // pred_check
      _
    $region3: #{tpu_custom_call.1} parent=1 // pred_check_branch
      %14 = sbr.rel (0) target = $region5
    $region4: #{tpu_custom_call.1} parent=1 // pred_region
      %s15 = sadd.s32 0, 0
      %s17 = ssub.s32 256, 256
      %18 = vsyncadd [#allocation3], %s17
      %s19 = smul.addr %s15, 128
      %s20 = scalar_lea.hbm %s0, %s19
      %s21 = sshll.u32 [#allocation2], 4
      %s22 = int_to_ptr.vmem [resolvable:$true] %s21
      %27 = dma.hbm_to_vmem [thread:$0]  %s20, 256, %s22, [#allocation3], 128, 128, 8
    $region5: #{tpu_custom_call.1} parent=1 // pred_fallthru
      _
    // Predicated region
    $region6: #{tpu_custom_call.1} parent=1 // pred_check
      _
    $region7: #{tpu_custom_call.1} parent=1 // pred_check_branch
      %29 = sbr.rel (0) target = $region9
    $region8: #{tpu_custom_call.1} parent=1 // pred_region
      %s30 = sadd.s32 0, 0
      %s32 = ssub.s32 256, 256
      %33 = vsyncadd [#allocation6], %s32
      %s34 = smul.addr %s30, 128
      %s35 = scalar_lea.hbm %s1, %s34
      %s36 = sshll.u32 [#allocation5], 4
      %s37 = int_to_ptr.vmem [resolvable:$true] %s36
      %42 = dma.hbm_to_vmem [thread:$0]  %s35, 256, %s37, [#allocation6], 128, 128, 8
    $region9: #{tpu_custom_call.1} parent=1 // pred_fallthru
      _
    // Predicated region
    $region10: #{tpu_custom_call.1} parent=1 // pred_check
      _
    $region11: #{tpu_custom_call.1} parent=1 // pred_check_branch
      %44 = sbr.rel (0) target = $region13
    $region12: #{tpu_custom_call.1} parent=1 // pred_region
      %45 = dma.done [#allocation3], 256
    $region13: #{tpu_custom_call.1} parent=1 // pred_fallthru
      _
    // Predicated region
    $region14: #{tpu_custom_call.1} parent=1 // pred_check
      _
    $region15: #{tpu_custom_call.1} parent=1 // pred_check_branch
      %47 = sbr.rel (0) target = $region17
    $region16: #{tpu_custom_call.1} parent=1 // pred_region
      %48 = dma.done [#allocation6], 256
    $region17: #{tpu_custom_call.1} parent=1 // pred_fallthru
      _
    %s49 = sadd.s32 0, 0
    %s50 = sadd.s32 0, 0
    %p51 = scmp.eq.s32.totalorder 0, 0
    // Predicated region
    $region18: #{tpu_custom_call.1} parent=1 // pred_check
      %p52 = pneg %p51
    $region19: #{tpu_custom_call.1} parent=1 // pred_check_branch
      %54 = sbr.rel (%p52) target = $region21
    $region20: #{tpu_custom_call.1} parent=1 // pred_region
      %vm55 = vcmask 254976
      %56 = vst.msk [vmem:[#allocation7] sm:$0x3] %vm55, 0.0
      %57 = vst.msk [vmem:[#allocation8] sm:$0x3] %vm55, 0.0
    $region21: #{tpu_custom_call.1} parent=1 // pred_fallthru
      _
    %v58 = vld [vmem:[#allocation7] sm:$0x3]
    %v59 = vld [vmem:[#allocation2] sm:$0xff]
    %v60 = vld [vmem:[#allocation2 + $0x8] sm:$0xff]
    %vm61 = vcmask 261120
    %v62 = vsel %vm61, %v59, 0.0
    %v63 = vrot.slane %v62, 4
    %v64 = vadd.f32 %v62, %v63
    %v65 = vrot.slane %v64, 2
    %v66 = vadd.f32 %v64, %v65
    %v67 = vrot.slane %v66, 1
    %v68 = vadd.f32 %v66, %v67
    %v69 = vsel %vm61, %v60, 0.0
    %v70 = vrot.slane %v69, 4
    %v71 = vadd.f32 %v69, %v70
    %v72 = vrot.slane %v71, 2
    %v73 = vadd.f32 %v71, %v72
    %v74 = vrot.slane %v73, 1
    %v75 = vadd.f32 %v73, %v74
    %vm78 = vcmask 1041409
    %v79 = vsel %vm78, %v75, %v68
    %v81 = vadd.f32 %v58, %v79
    %vm82 = vcmask 254976
    %83 = vst.msk [vmem:[#allocation7] sm:$0x3] %vm82, %v81
    %v84 = vld [vmem:[#allocation8] sm:$0x3]
    %v85 = vld [vmem:[#allocation5] sm:$0xff]
    %v86 = vld [vmem:[#allocation5 + $0x8] sm:$0xff]
    %v87 = vsel %vm61, %v85, 0.0
    %v88 = vrot.slane %v87, 4
    %v89 = vadd.f32 %v87, %v88
    %v90 = vrot.slane %v89, 2
    %v91 = vadd.f32 %v89, %v90
    %v92 = vrot.slane %v91, 1
    %v93 = vadd.f32 %v91, %v92
    %v94 = vsel %vm61, %v86, 0.0
    %v95 = vrot.slane %v94, 4
    %v96 = vadd.f32 %v94, %v95
    %v97 = vrot.slane %v96, 2
    %v98 = vadd.f32 %v96, %v97
    %v99 = vrot.slane %v98, 1
    %v100 = vadd.f32 %v98, %v99
    %v103 = vsel %vm78, %v100, %v93
    %v105 = vadd.f32 %v84, %v103
    %106 = vst.msk [vmem:[#allocation8] sm:$0x3] %vm82, %v105
    // Predicated region
    $region22: #{tpu_custom_call.1} parent=1 // pred_check
      _
    $region23: #{tpu_custom_call.1} parent=1 // pred_check_branch
      %108 = sbr.rel (0) target = $region25
    $region24: #{tpu_custom_call.1} parent=1 // pred_region
      %s110 = ssub.s32 32, 32
      %111 = vsyncadd [#allocation4], %s110
      %s113 = sshll.u32 [#allocation7], 4
      %s114 = int_to_ptr.vmem [resolvable:$true] %s113
      %116 = dma.vmem_to_hbm [thread:$0]  %s114, 32, %s2, [#allocation4]
    $region25: #{tpu_custom_call.1} parent=1 // pred_fallthru
      _
    // Predicated region
    $region26: #{tpu_custom_call.1} parent=1 // pred_check
      _
    $region27: #{tpu_custom_call.1} parent=1 // pred_check_branch
      %118 = sbr.rel (0) target = $region29
    $region28: #{tpu_custom_call.1} parent=1 // pred_region
      %s120 = ssub.s32 32, 32
      %121 = vsyncadd [#allocation9], %s120
      %s123 = sshll.u32 [#allocation8], 4
      %s124 = int_to_ptr.vmem [resolvable:$true] %s123
      %126 = dma.vmem_to_hbm [thread:$0]  %s124, 32, %s3, [#allocation9]
    $region29: #{tpu_custom_call.1} parent=1 // pred_fallthru
      _
    // Predicated region
    $region30: #{tpu_custom_call.1} parent=1 // pred_check
      _
    $region31: #{tpu_custom_call.1} parent=1 // pred_check_branch
      %128 = sbr.rel (0) target = $region33
    $region32: #{tpu_custom_call.1} parent=1 // pred_region
      %129 = dma.done [#allocation4], 32
    $region33: #{tpu_custom_call.1} parent=1 // pred_fallthru
      _
    // Predicated region
    $region34: #{tpu_custom_call.1} parent=1 // pred_check
      _
    $region35: #{tpu_custom_call.1} parent=1 // pred_check_branch
      %131 = sbr.rel (0) target = $region37
    $region36: #{tpu_custom_call.1} parent=1 // pred_region
      %132 = dma.done [#allocation9], 32
    $region37: #{tpu_custom_call.1} parent=1 // pred_fallthru
      _
    %133 = vsyncpa [#allocation3], 1
    %134 = vsyncpa [#allocation6], 1
    %135 = vsyncpa [#allocation4], 1
    %136 = vsyncpa [#allocation9], 1

</llo_original>
